<compile_context>
chip_gen: v6e
topology: v6e:2x2x1
jax: 0.10.0
libtpu: 0.0.40
codegen_flags: <defaults>
</compile_context>

<pallas_src>
import numpy as np
import jax
import jax.numpy as jnp
from jax.experimental import pallas as pl
from jax.experimental.pallas import tpu as pltpu


def _round_up(x, m):
    return ((x + m - 1) // m) * m


def _cdiv(a, b):
    return (a + b - 1) // b


def _make_kernel(n_mats):
    """Kernel body: n_mats x (W^T @ x + b), ReLU on all but the last.

    Feature-major layout: activations are (features, batch_tile) so the batch fills
    the 128-lane axis and all stores are unmasked full-lane vst.
    """

    def kernel(*refs):
        z_ref = refs[0]
        out_ref = refs[-1]
        x = z_ref[...]                                   # (latent, Bt), f32
        for i in range(n_mats):
            w_ref = refs[1 + 2 * i]                      # (N_out, N_in)
            b_ref = refs[2 + 2 * i]                      # (N_out, 1)
            y = jnp.dot(w_ref[...], x.astype(w_ref.dtype),
                        preferred_element_type=jnp.float32) + b_ref[...]
            x = jnp.maximum(y, 0.0) if i < n_mats - 1 else y
        out_ref[...] = x.astype(out_ref.dtype)

    return kernel


def _prepare_mats(params, *, feat_dim, hidden_layer_sizes, encoder_last_dense_dim,
                  compute_dtype):
    """Fold every layer into a (W^T, bias-column) pair for a feature-major matmul chain.

    Activation row index inside the kernel is l*C + c (length-major, channel-minor),
    which is exactly PyTorch's x.view(B, L, C) of the dense output, so the
    transpose(1, 2) in the reference forward is a pure relabeling.
    """
    C0 = hidden_layer_sizes[-1]
    E = encoder_last_dense_dim
    assert E % C0 == 0, "encoder_last_dense_dim must be divisible by hidden[-1]"
    L0 = E // C0
    num_deconv = len(hidden_layer_sizes)

    mats = []

    # ---- dense: x = Wd @ z + bd  (PyTorch Linear weight is already (E, latent)) ----
    wd = np.asarray(params["dense_w"], np.float32)       # (E, latent)
    bd = np.asarray(params["dense_b"], np.float32)       # (E,)
    mats.append((np.ascontiguousarray(wd), bd[:, None]))

    # ---- ConvTranspose1d chain as structured dense matmuls -------------------------
    # out[t*Cout + co] = sum_{l,ci,k : t == 2l+k-1, 0<=t<2L} w[ci,co,k] * x[l*Cin + ci]
    # (stride 2, padding 1, output_padding 1  ->  Lout = 2L)
    L = L0
    for i in range(num_deconv):
        w = np.asarray(params[f"deconv{i}_w"], np.float32)    # (Cin, Cout, 3)
        b = np.asarray(params[f"deconv{i}_b"], np.float32)    # (Cout,)
        Cin, Cout, _ = w.shape
        Lout = 2 * L
        Wt = np.zeros((Lout * Cout, L * Cin), np.float32)
        for l in range(L):
            for k in range(3):
                t = 2 * l + k - 1
                if 0 <= t < Lout:
                    Wt[t * Cout:(t + 1) * Cout, l * Cin:(l + 1) * Cin] += w[:, :, k].T
        b_tiled = np.tile(b, Lout)[:, None]                    # (Lout*Cout, 1)
        mats.append((Wt, b_tiled))
        L = Lout
    Lf = L

    # ---- final dense: PyTorch flattens channel-major (c*Lf + t); our rows are
    # length-major (t*F + c) -> permute the input axis of the weight.
    wf = np.asarray(params["final_w"], np.float32)        # (O, F*Lf)
    bf = np.asarray(params["final_b"], np.float32)        # (O,)
    O = wf.shape[0]
    assert wf.shape[1] == feat_dim * Lf
    Wf_t = wf.reshape(O, feat_dim, Lf).transpose(0, 2, 1).reshape(O, Lf * feat_dim)
    mats.append((np.ascontiguousarray(Wf_t), bf[:, None]))

    flat = []
    for W, b in mats:
        flat.append(jnp.asarray(W, dtype=compute_dtype))   # matmul operand
        flat.append(jnp.asarray(b, dtype=jnp.float32))     # bias stays fp32
    return flat, Lf


def _choose_batch_tiling(B, batch_block):
    """Pick (Bt, B_pad): lane-aligned (multiple of 128) batch tiles, few fat steps.

    B <= 128  -> single 128-wide step (one v7x TC idles; negligible at this size).
    B  > 128  -> an even number of steps so both v7x TensorCores get balanced work
                 under dimension_semantics=("parallel",); no-op on v5e/v6e (1 TC).
    """
    B_pad = _round_up(B, 128)
    if B_pad <= 128:
        return B_pad, B_pad
    Bt = min(_round_up(max(int(batch_block), 128), 128),
             _round_up(_cdiv(B_pad, 2), 128))
    n = _cdiv(B_pad, Bt)
    if n % 2:
        n += 1
    return Bt, Bt * n


def residual_connection_forward(z, params, *, seq_len, feat_dim, hidden_layer_sizes,
                                encoder_last_dense_dim, batch_block=512,
                                compute_dtype=jnp.float32):
    B, latent_dim = z.shape
    O = seq_len * feat_dim

    flat, _ = _prepare_mats(
        params, feat_dim=feat_dim, hidden_layer_sizes=hidden_layer_sizes,
        encoder_last_dense_dim=encoder_last_dense_dim, compute_dtype=compute_dtype)
    n_mats = len(flat) // 2

    Bt, B_pad = _choose_batch_tiling(B, batch_block)

    # Feature-major: batch on the 128-lane axis; transpose + pad with XLA.
    z_t = jnp.transpose(z.astype(jnp.float32))                 # (latent, B)
    if B_pad != B:
        z_t = jnp.pad(z_t, ((0, 0), (0, B_pad - B)))

    in_specs = [pl.BlockSpec((latent_dim, Bt), lambda b: (0, b))]
    for arr in flat:
        # full-array block, constant index -> DMA'd once, stays resident in VMEM
        in_specs.append(pl.BlockSpec(arr.shape, lambda b: (0, 0)))

    # Advisory cost estimate so XLA schedules this tiny custom call sensibly.
    flops = 0
    bytes_accessed = z_t.size * 4 + B_pad * O * 4
    for i in range(n_mats):
        w = flat[2 * i]
        b = flat[2 * i + 1]
        flops += 2 * B_pad * int(w.shape[0]) * int(w.shape[1])
        bytes_accessed += w.size * w.dtype.itemsize + b.size * b.dtype.itemsize

    out_t = pl.pallas_call(
        _make_kernel(n_mats),
        out_shape=jax.ShapeDtypeStruct((O, B_pad), jnp.float32),
        grid=(B_pad // Bt,),
        in_specs=in_specs,
        out_specs=pl.BlockSpec((O, Bt), lambda b: (0, b)),
        compiler_params=pltpu.CompilerParams(
            dimension_semantics=("parallel",)),
        cost_estimate=pl.CostEstimate(
            flops=flops, transcendentals=0, bytes_accessed=bytes_accessed),
    )(z_t, *flat)

    return jnp.transpose(out_t[:, :B]).reshape(B, seq_len, feat_dim)


# ----------------------- pure numpy reference --------------------------------------
def _conv_transpose1d_ref(x, w, b, stride=2, padding=1, output_padding=1):
    """ConvTranspose1d via the standard zero-insertion + correlation identity."""
    Bn, Cin, L = x.shape
    Cin_w, Cout, K = w.shape
    assert Cin == Cin_w
    Lout = (L - 1) * stride - 2 * padding + K + output_padding
    u = np.zeros((Bn, Cin, (L - 1) * stride + 1), dtype=x.dtype)
    u[:, :, ::stride] = x
    out = np.zeros((Bn, Cout, Lout), dtype=x.dtype)
    for t in range(Lout):
        for k in range(K):
            j = t + padding - k
            if 0 <= j < u.shape[2]:
                out[:, :, t] += np.einsum("bi,io->bo", u[:, :, j], w[:, :, k])
    return out + b[None, :, None]


def ref_forward(z, params, *, seq_len, feat_dim, hidden_layer_sizes,
                encoder_last_dense_dim):
    # TODO(synk): validated against the documented PyTorch ConvTranspose1d convention
    # (stride=2, padding=1, output_padding=1 -> Lout=2L); torch itself cannot be
    # imported in this self-contained script for a direct cross-check.
    z = np.asarray(z, np.float64)
    B = z.shape[0]
    C0 = hidden_layer_sizes[-1]
    wd = np.asarray(params["dense_w"], np.float64)
    bd = np.asarray(params["dense_b"], np.float64)
    x = np.maximum(z @ wd.T + bd, 0.0)
    x = x.reshape(B, -1, C0).transpose(0, 2, 1)          # (B, C, L)
    for i in range(len(hidden_layer_sizes)):
        w = np.asarray(params[f"deconv{i}_w"], np.float64)
        b = np.asarray(params[f"deconv{i}_b"], np.float64)
        x = np.maximum(_conv_transpose1d_ref(x, w, b), 0.0)
    x = x.reshape(B, -1)                                  # channel-major flatten
    wf = np.asarray(params["final_w"], np.float64)
    bf = np.asarray(params["final_b"], np.float64)
    out = x @ wf.T + bf
    return out.reshape(B, seq_len, feat_dim)


if __name__ == "__main__":
    seq_len, feat_dim = 8, 4
    hidden_layer_sizes = [16, 32]
    latent_dim = 8
    encoder_last_dense_dim = 64

    num_deconv = len(hidden_layer_sizes)
    C0 = hidden_layer_sizes[-1]
    L0 = encoder_last_dense_dim // C0
    Lf = L0 * (2 ** num_deconv)
    O = seq_len * feat_dim
    channels = [hidden_layer_sizes[-1]] + list(reversed(hidden_layer_sizes[:-1])) + [feat_dim]

    key = jax.random.PRNGKey(0)
    keys = jax.random.split(key, 2 * (num_deconv + 2) + 2)
    params = {
        "dense_w": 0.1 * jax.random.normal(keys[0], (encoder_last_dense_dim, latent_dim), jnp.float32),
        "dense_b": 0.1 * jax.random.normal(keys[1], (encoder_last_dense_dim,), jnp.float32),
        "final_w": 0.1 * jax.random.normal(keys[2], (O, feat_dim * Lf), jnp.float32),
        "final_b": 0.1 * jax.random.normal(keys[3], (O,), jnp.float32),
    }
    for i in range(num_deconv):
        cin, cout = channels[i], channels[i + 1]
        params[f"deconv{i}_w"] = 0.1 * jax.random.normal(keys[4 + 2 * i], (cin, cout, 3), jnp.float32)
        params[f"deconv{i}_b"] = 0.1 * jax.random.normal(keys[5 + 2 * i], (cout,), jnp.float32)

    # Case 1: B=66 (not a multiple of 128) -> single lane-dense 128-wide grid step.
    B1 = 66
    z1 = jax.random.normal(keys[-2], (B1, latent_dim), jnp.float32)
    ref1 = ref_forward(
        z1, params, seq_len=seq_len, feat_dim=feat_dim,
        hidden_layer_sizes=hidden_layer_sizes,
        encoder_last_dense_dim=encoder_last_dense_dim)
    out1 = residual_connection_forward(
        z1, params, seq_len=seq_len, feat_dim=feat_dim,
        hidden_layer_sizes=hidden_layer_sizes,
        encoder_last_dense_dim=encoder_last_dense_dim)
    out1 = jax.block_until_ready(out1)
    assert out1.shape == (B1, seq_len, feat_dim)
    np.testing.assert_allclose(np.asarray(out1), ref1, rtol=5e-4, atol=5e-4)

    # Case 2: B=300 -> padded to an even number of lane-aligned tiles (2 x 256),
    # exercising the even-length "parallel" grid that feeds both v7x TensorCores.
    B2 = 300
    z2 = jax.random.normal(keys[-1], (B2, latent_dim), jnp.float32)
    ref2 = ref_forward(
        z2, params, seq_len=seq_len, feat_dim=feat_dim,
        hidden_layer_sizes=hidden_layer_sizes,
        encoder_last_dense_dim=encoder_last_dense_dim)
    out2 = residual_connection_forward(
        z2, params, seq_len=seq_len, feat_dim=feat_dim,
        hidden_layer_sizes=hidden_layer_sizes,
        encoder_last_dense_dim=encoder_last_dense_dim,
        batch_block=512)
    out2 = jax.block_until_ready(out2)
    assert out2.shape == (B2, seq_len, feat_dim)
    np.testing.assert_allclose(np.asarray(out2), ref2, rtol=5e-4, atol=5e-4)

    print("KERNEL_OK")
</pallas_src>

<mosaic_0001>
module attributes {stable_mosaic.version = 11 : i64} {
  func.func @kernel(%arg0: i32, %arg1: memref<8x128xf32, #tpu.memory_space<vmem>>, %arg2: memref<64x8xf32, #tpu.memory_space<vmem>>, %arg3: memref<64x1xf32, #tpu.memory_space<vmem>>, %arg4: memref<64x64xf32, #tpu.memory_space<vmem>>, %arg5: memref<64x1xf32, #tpu.memory_space<vmem>>, %arg6: memref<32x64xf32, #tpu.memory_space<vmem>>, %arg7: memref<32x1xf32, #tpu.memory_space<vmem>>, %arg8: memref<32x32xf32, #tpu.memory_space<vmem>>, %arg9: memref<32x1xf32, #tpu.memory_space<vmem>>, %arg10: memref<32x128xf32, #tpu.memory_space<vmem>>) attributes {dimension_semantics = [#tpu.dimension_semantics<parallel>], iteration_bounds = array<i64: 1>, scalar_prefetch = 0 : i64, scratch_operands = 0 : i64, tpu.core_type = #tpu.core_type<tc>, window_params = [{transform_indices = @transform_0, window_bounds = array<i64: 8, 128>}, {pipeline_mode = #tpu.pipeline_mode<synchronous>, transform_indices = @transform_1, window_bounds = array<i64: 64, 8>}, {pipeline_mode = #tpu.pipeline_mode<synchronous>, transform_indices = @transform_2, window_bounds = array<i64: 64, 1>}, {pipeline_mode = #tpu.pipeline_mode<synchronous>, transform_indices = @transform_3, window_bounds = array<i64: 64, 64>}, {pipeline_mode = #tpu.pipeline_mode<synchronous>, transform_indices = @transform_4, window_bounds = array<i64: 64, 1>}, {pipeline_mode = #tpu.pipeline_mode<synchronous>, transform_indices = @transform_5, window_bounds = array<i64: 32, 64>}, {pipeline_mode = #tpu.pipeline_mode<synchronous>, transform_indices = @transform_6, window_bounds = array<i64: 32, 1>}, {pipeline_mode = #tpu.pipeline_mode<synchronous>, transform_indices = @transform_7, window_bounds = array<i64: 32, 32>}, {pipeline_mode = #tpu.pipeline_mode<synchronous>, transform_indices = @transform_8, window_bounds = array<i64: 32, 1>}, {transform_indices = @transform_9, window_bounds = array<i64: 32, 128>}]} {
    %c0 = arith.constant 0 : index
    %c0_0 = arith.constant 0 : index
    %0 = vector.load %arg1[%c0, %c0_0] : memref<8x128xf32, #tpu.memory_space<vmem>>, vector<8x128xf32>
    %c0_1 = arith.constant 0 : index
    %c0_2 = arith.constant 0 : index
    %1 = vector.load %arg2[%c0_1, %c0_2] : memref<64x8xf32, #tpu.memory_space<vmem>>, vector<64x8xf32>
    %cst = arith.constant dense<0.000000e+00> : vector<64x128xf32>
    %2 = tpu.matmul %1, %0, %cst {dimension_numbers = #tpu.dot_dimension_numbers<[1], [0], [0], [1], [0, 0, 1, 1], [], []>} : vector<64x8xf32>, vector<8x128xf32>, vector<64x128xf32> -> vector<64x128xf32>
    %c0_3 = arith.constant 0 : index
    %c0_4 = arith.constant 0 : index
    %3 = vector.load %arg3[%c0_3, %c0_4] : memref<64x1xf32, #tpu.memory_space<vmem>>, vector<64x1xf32>
    %4 = vector.broadcast %3 : vector<64x1xf32> to vector<64x128xf32>
    %5 = arith.addf %2, %4 : vector<64x128xf32>
    %cst_5 = arith.constant 0.000000e+00 : f32
    %6 = vector.broadcast %cst_5 : f32 to vector<64x128xf32>
    %7 = arith.maximumf %5, %6 : vector<64x128xf32>
    %c0_6 = arith.constant 0 : index
    %c0_7 = arith.constant 0 : index
    %8 = vector.load %arg4[%c0_6, %c0_7] : memref<64x64xf32, #tpu.memory_space<vmem>>, vector<64x64xf32>
    %cst_8 = arith.constant dense<0.000000e+00> : vector<64x128xf32>
    %9 = tpu.matmul %8, %7, %cst_8 {dimension_numbers = #tpu.dot_dimension_numbers<[1], [0], [0], [1], [0, 0, 1, 1], [], []>} : vector<64x64xf32>, vector<64x128xf32>, vector<64x128xf32> -> vector<64x128xf32>
    %c0_9 = arith.constant 0 : index
    %c0_10 = arith.constant 0 : index
    %10 = vector.load %arg5[%c0_9, %c0_10] : memref<64x1xf32, #tpu.memory_space<vmem>>, vector<64x1xf32>
    %11 = vector.broadcast %10 : vector<64x1xf32> to vector<64x128xf32>
    %12 = arith.addf %9, %11 : vector<64x128xf32>
    %cst_11 = arith.constant 0.000000e+00 : f32
    %13 = vector.broadcast %cst_11 : f32 to vector<64x128xf32>
    %14 = arith.maximumf %12, %13 : vector<64x128xf32>
    %c0_12 = arith.constant 0 : index
    %c0_13 = arith.constant 0 : index
    %15 = vector.load %arg6[%c0_12, %c0_13] : memref<32x64xf32, #tpu.memory_space<vmem>>, vector<32x64xf32>
    %cst_14 = arith.constant dense<0.000000e+00> : vector<32x128xf32>
    %16 = tpu.matmul %15, %14, %cst_14 {dimension_numbers = #tpu.dot_dimension_numbers<[1], [0], [0], [1], [0, 0, 1, 1], [], []>} : vector<32x64xf32>, vector<64x128xf32>, vector<32x128xf32> -> vector<32x128xf32>
    %c0_15 = arith.constant 0 : index
    %c0_16 = arith.constant 0 : index
    %17 = vector.load %arg7[%c0_15, %c0_16] : memref<32x1xf32, #tpu.memory_space<vmem>>, vector<32x1xf32>
    %18 = vector.broadcast %17 : vector<32x1xf32> to vector<32x128xf32>
    %19 = arith.addf %16, %18 : vector<32x128xf32>
    %cst_17 = arith.constant 0.000000e+00 : f32
    %20 = vector.broadcast %cst_17 : f32 to vector<32x128xf32>
    %21 = arith.maximumf %19, %20 : vector<32x128xf32>
    %c0_18 = arith.constant 0 : index
    %c0_19 = arith.constant 0 : index
    %22 = vector.load %arg8[%c0_18, %c0_19] : memref<32x32xf32, #tpu.memory_space<vmem>>, vector<32x32xf32>
    %cst_20 = arith.constant dense<0.000000e+00> : vector<32x128xf32>
    %23 = tpu.matmul %22, %21, %cst_20 {dimension_numbers = #tpu.dot_dimension_numbers<[1], [0], [0], [1], [0, 0, 1, 1], [], []>} : vector<32x32xf32>, vector<32x128xf32>, vector<32x128xf32> -> vector<32x128xf32>
    %c0_21 = arith.constant 0 : index
    %c0_22 = arith.constant 0 : index
    %24 = vector.load %arg9[%c0_21, %c0_22] : memref<32x1xf32, #tpu.memory_space<vmem>>, vector<32x1xf32>
    %25 = vector.broadcast %24 : vector<32x1xf32> to vector<32x128xf32>
    %26 = arith.addf %23, %25 : vector<32x128xf32>
    %c0_23 = arith.constant 0 : index
    %c0_24 = arith.constant 0 : index
    %27 = vector.load %arg10[%c0_23, %c0_24] : memref<32x128xf32, #tpu.memory_space<vmem>>, vector<32x128xf32>
    tpu.vector_store %arg10[%c0_23, %c0_24], %26 {strides = array<i32>} : memref<32x128xf32, #tpu.memory_space<vmem>>, vector<32x128xf32>,
    return
  }
  func.func @transform_0(%arg0: i32) -> (i32, i32) {
    %c0_i32 = arith.constant 0 : i32
    %c0_i32_0 = arith.constant 0 : i32
    return %c0_i32, %arg0 : i32, i32
  }
  func.func @transform_1(%arg0: i32) -> (i32, i32) {
    %c0_i32 = arith.constant 0 : i32
    %c0_i32_0 = arith.constant 0 : i32
    %c0_i32_1 = arith.constant 0 : i32
    return %c0_i32, %c0_i32_0 : i32, i32
  }
  func.func @transform_2(%arg0: i32) -> (i32, i32) {
    %c0_i32 = arith.constant 0 : i32
    %c0_i32_0 = arith.constant 0 : i32
    %c0_i32_1 = arith.constant 0 : i32
    return %c0_i32, %c0_i32_0 : i32, i32
  }
  func.func @transform_3(%arg0: i32) -> (i32, i32) {
    %c0_i32 = arith.constant 0 : i32
    %c0_i32_0 = arith.constant 0 : i32
    %c0_i32_1 = arith.constant 0 : i32
    return %c0_i32, %c0_i32_0 : i32, i32
  }
  func.func @transform_4(%arg0: i32) -> (i32, i32) {
    %c0_i32 = arith.constant 0 : i32
    %c0_i32_0 = arith.constant 0 : i32
    %c0_i32_1 = arith.constant 0 : i32
    return %c0_i32, %c0_i32_0 : i32, i32
  }
  func.func @transform_5(%arg0: i32) -> (i32, i32) {
    %c0_i32 = arith.constant 0 : i32
    %c0_i32_0 = arith.constant 0 : i32
    %c0_i32_1 = arith.constant 0 : i32
    return %c0_i32, %c0_i32_0 : i32, i32
  }
  func.func @transform_6(%arg0: i32) -> (i32, i32) {
    %c0_i32 = arith.constant 0 : i32
    %c0_i32_0 = arith.constant 0 : i32
    %c0_i32_1 = arith.constant 0 : i32
    return %c0_i32, %c0_i32_0 : i32, i32
  }
  func.func @transform_7(%arg0: i32) -> (i32, i32) {
    %c0_i32 = arith.constant 0 : i32
    %c0_i32_0 = arith.constant 0 : i32
    %c0_i32_1 = arith.constant 0 : i32
    return %c0_i32, %c0_i32_0 : i32, i32
  }
  func.func @transform_8(%arg0: i32) -> (i32, i32) {
    %c0_i32 = arith.constant 0 : i32
    %c0_i32_0 = arith.constant 0 : i32
    %c0_i32_1 = arith.constant 0 : i32
    return %c0_i32, %c0_i32_0 : i32, i32
  }
  func.func @transform_9(%arg0: i32) -> (i32, i32) {
    %c0_i32 = arith.constant 0 : i32
    %c0_i32_0 = arith.constant 0 : i32
    return %c0_i32, %arg0 : i32, i32
  }
}

</mosaic_0001>

<llo_original>
// kernel: tpu_custom_call.1
$region0: #{tpu_custom_call.1}
  #allocation0 [shape = 'u32[]', space=smem, size = 0x4, offset = 0x4, fixed_abs, tag = 'smem constant byte address 0x4 - core index']
  #allocation1 [shape = 'u32[144,128]{1,0:T(1,128)}', space=vmem, size = 0x12000, scoped, tag = 'internal scratch']
  %s0 = inlined_call_operand.vmem [shape: f32[8,128], index: 0, kind: input, shape index: {}]
  %s1 = inlined_call_operand.vmem [shape: f32[64,8], index: 1, kind: input, shape index: {}]
  %s2 = inlined_call_operand.vmem [shape: f32[64,1], index: 2, kind: input, shape index: {}]
  %s3 = inlined_call_operand.vmem [shape: f32[64,64], index: 3, kind: input, shape index: {}]
  %s4 = inlined_call_operand.vmem [shape: f32[64,1], index: 4, kind: input, shape index: {}]
  %s5 = inlined_call_operand.vmem [shape: f32[32,64], index: 5, kind: input, shape index: {}]
  %s6 = inlined_call_operand.vmem [shape: f32[32,1], index: 6, kind: input, shape index: {}]
  %s7 = inlined_call_operand.vmem [shape: f32[32,32], index: 7, kind: input, shape index: {}]
  %s8 = inlined_call_operand.vmem [shape: f32[32,1], index: 8, kind: input, shape index: {}]
  %s9 = inlined_call_operand.hbm [shape: f32[32,128], index: 9, kind: output, shape index: {}]
  %s10 = sld [smem:[#allocation0]]
  $region46: #{tpu_custom_call.1} parent=0
    _
  %s12 = ssub.s32 1, %s10
  %s13 = scalar_select 0, %s12, %s10
  $region1: #{tpu_custom_call.1} parent=0
    #allocation2 [shape = 'u8[16384]{0}', space=vmem, size = 0x4000, scoped, tag = 'output window, operand 0, single buffered']
    #allocation3 [shape = 's32[1]{0}', space=sflag, size = 0x4, scoped, tag = 'scoped memory for tpu_custom_call.1']
    %14 = vsyncpa [#allocation3], 0
    // Predicated region
    $region2: #{tpu_custom_call.1} parent=1 // pred_check
      _
    $region3: #{tpu_custom_call.1} parent=1 // pred_check_branch
      %16 = sbr.rel (0) target = $region5
    $region4: #{tpu_custom_call.1} parent=1 // pred_region
      _
    $region5: #{tpu_custom_call.1} parent=1 // pred_fallthru
      _
    // Predicated region
    $region6: #{tpu_custom_call.1} parent=1 // pred_check
      _
    $region7: #{tpu_custom_call.1} parent=1 // pred_check_branch
      %18 = sbr.rel (0) target = $region9
    $region8: #{tpu_custom_call.1} parent=1 // pred_region
      _
    $region9: #{tpu_custom_call.1} parent=1 // pred_fallthru
      _
    // Predicated region
    $region10: #{tpu_custom_call.1} parent=1 // pred_check
      _
    $region11: #{tpu_custom_call.1} parent=1 // pred_check_branch
      %20 = sbr.rel (0) target = $region13
    $region12: #{tpu_custom_call.1} parent=1 // pred_region
      _
    $region13: #{tpu_custom_call.1} parent=1 // pred_fallthru
      _
    // Predicated region
    $region14: #{tpu_custom_call.1} parent=1 // pred_check
      _
    $region15: #{tpu_custom_call.1} parent=1 // pred_check_branch
      %22 = sbr.rel (0) target = $region17
    $region16: #{tpu_custom_call.1} parent=1 // pred_region
      _
    $region17: #{tpu_custom_call.1} parent=1 // pred_fallthru
      _
    // Predicated region
    $region18: #{tpu_custom_call.1} parent=1 // pred_check
      _
    $region19: #{tpu_custom_call.1} parent=1 // pred_check_branch
      %24 = sbr.rel (0) target = $region21
    $region20: #{tpu_custom_call.1} parent=1 // pred_region
      _
    $region21: #{tpu_custom_call.1} parent=1 // pred_fallthru
      _
    // Predicated region
    $region22: #{tpu_custom_call.1} parent=1 // pred_check
      _
    $region23: #{tpu_custom_call.1} parent=1 // pred_check_branch
      %26 = sbr.rel (0) target = $region25
    $region24: #{tpu_custom_call.1} parent=1 // pred_region
      _
    $region25: #{tpu_custom_call.1} parent=1 // pred_fallthru
      _
    // Predicated region
    $region26: #{tpu_custom_call.1} parent=1 // pred_check
      _
    $region27: #{tpu_custom_call.1} parent=1 // pred_check_branch
      %28 = sbr.rel (0) target = $region29
    $region28: #{tpu_custom_call.1} parent=1 // pred_region
      _
    $region29: #{tpu_custom_call.1} parent=1 // pred_fallthru
      _
    // Predicated region
    $region30: #{tpu_custom_call.1} parent=1 // pred_check
      _
    $region31: #{tpu_custom_call.1} parent=1 // pred_check_branch
      %30 = sbr.rel (0) target = $region33
    $region32: #{tpu_custom_call.1} parent=1 // pred_region
      _
    $region33: #{tpu_custom_call.1} parent=1 // pred_fallthru
      _
    // Predicated region
    $region34: #{tpu_custom_call.1} parent=1 // pred_check
      _
    $region35: #{tpu_custom_call.1} parent=1 // pred_check_branch
      %32 = sbr.rel (0) target = $region37
    $region36: #{tpu_custom_call.1} parent=1 // pred_region
      _
    $region37: #{tpu_custom_call.1} parent=1 // pred_fallthru
      _
    %v33 = vld [vmem:[%s0] sm:$0xff]
    %v34 = vld [vmem:[%s1] sm:$0xff]
    %v35 = vld [vmem:[%s1 + $0x8] sm:$0xff]
    %v36 = vld [vmem:[%s1 + $0x10] sm:$0xff]
    %v37 = vld [vmem:[%s1 + $0x18] sm:$0xff]
    %v38 = vld [vmem:[%s1 + $0x20] sm:$0xff]
    %v39 = vld [vmem:[%s1 + $0x28] sm:$0xff]
    %v40 = vld [vmem:[%s1 + $0x30] sm:$0xff]
    %v41 = vld [vmem:[%s1 + $0x38] sm:$0xff]
    %v42 = vld [vmem:[%s2] sm:$0xff]
    %v43 = vld [vmem:[%s2 + $0x8] sm:$0xff]
    %v44 = vld [vmem:[%s2 + $0x10] sm:$0xff]
    %v45 = vld [vmem:[%s2 + $0x18] sm:$0xff]
    %v46 = vld [vmem:[%s2 + $0x20] sm:$0xff]
    %v47 = vld [vmem:[%s2 + $0x28] sm:$0xff]
    %v48 = vld [vmem:[%s2 + $0x30] sm:$0xff]
    %v49 = vld [vmem:[%s2 + $0x38] sm:$0xff]
    %51 = vset.pattern.permute.xlu0 0
    %52 = vperm.xlu0 %51, %v42
    %v53 = vpop.permute.xlu0 %52
    %56 = vset.pattern.permute.xlu0 0
    %57 = vperm.xlu0 %56, %v43
    %v58 = vpop.permute.xlu0 %57
    %61 = vset.pattern.permute.xlu0 0
    %62 = vperm.xlu0 %61, %v44
    %v63 = vpop.permute.xlu0 %62
    %66 = vset.pattern.permute.xlu0 0
    %67 = vperm.xlu0 %66, %v45
    %v68 = vpop.permute.xlu0 %67
    %71 = vset.pattern.permute.xlu0 0
    %72 = vperm.xlu0 %71, %v46
    %v73 = vpop.permute.xlu0 %72
    %76 = vset.pattern.permute.xlu0 0
    %77 = vperm.xlu0 %76, %v47
    %v78 = vpop.permute.xlu0 %77
    %81 = vset.pattern.permute.xlu0 0
    %82 = vperm.xlu0 %81, %v48
    %v83 = vpop.permute.xlu0 %82
    %86 = vset.pattern.permute.xlu0 0
    %87 = vperm.xlu0 %86, %v49
    %v88 = vpop.permute.xlu0 %87
    %vm90 = vcmask 64512
    %v92 = vsel %vm90, %v34, 0
    %v95 = vsel %vm90, %v35, 0
    %v98 = vsel %vm90, %v36, 0
    %v101 = vsel %vm90, %v37, 0
    %v104 = vsel %vm90, %v38, 0
    %v107 = vsel %vm90, %v39, 0
    %v110 = vsel %vm90, %v40, 0
    %v113 = vsel %vm90, %v41, 0
    %115 = vmatprep.subr.mxu0 0.0
    %116 = vmatpush1.msra.mxu0 0.0
    %117 = vmatprep.subr.mxu0 0.0
    %118 = vmatpush1.msra.mxu0 0.0
    %119 = vmatprep.subr.mxu0 0.0
    %120 = vmatpush1.msra.mxu0 0.0
    %121 = vmatprep.subr.mxu0 0.0
    %122 = vmatpush1.msra.mxu0 0.0
    %123 = vmatprep.subr.mxu0 0.0
    %124 = vmatpush1.msra.mxu0 0.0
    %125 = vmatprep.subr.mxu0 0.0
    %126 = vmatpush1.msra.mxu0 0.0
    %127 = vmatprep.subr.mxu0 0.0
    %128 = vmatpush1.msra.mxu0 0.0
    %129 = vmatprep.subr.mxu0 0.0
    %130 = vmatpush1.msra.mxu0 0.0
    %131 = vmatprep.subr.mxu0 0.0
    %132 = vmatpush1.msra.mxu0 0.0
    %133 = vmatprep.subr.mxu0 0.0
    %134 = vmatpush1.msra.mxu0 0.0
    %135 = vmatprep.subr.mxu0 0.0
    %136 = vmatpush1.msra.mxu0 0.0
    %137 = vmatprep.subr.mxu0 0.0
    %138 = vmatpush1.msra.mxu0 0.0
    %139 = vmatprep.subr.mxu0 0.0
    %140 = vmatpush1.msra.mxu0 0.0
    %141 = vmatprep.subr.mxu0 0.0
    %142 = vmatpush1.msra.mxu0 0.0
    %143 = vmatprep.subr.mxu0 0.0
    %144 = vmatpush1.msra.mxu0 0.0
    %145 = vmatprep.subr.mxu0 0.0
    %146 = vmatpush1.msra.mxu0 %v33
    %147 = vmatprep.subr.mxu0 0.0
    %148 = vmatpush2.msra.mxu0 0.0
    %149 = vmatprep.subr.mxu0 0.0
    %150 = vmatpush2.msra.mxu0 0.0
    %151 = vmatprep.subr.mxu0 0.0
    %152 = vmatpush2.msra.mxu0 0.0
    %153 = vmatprep.subr.mxu0 0.0
    %154 = vmatpush2.msra.mxu0 0.0
    %155 = vmatprep.subr.mxu0 0.0
    %156 = vmatpush2.msra.mxu0 0.0
    %157 = vmatprep.subr.mxu0 0.0
    %158 = vmatpush2.msra.mxu0 0.0
    %159 = vmatprep.subr.mxu0 0.0
    %160 = vmatpush2.msra.mxu0 0.0
    %161 = vmatprep.subr.mxu0 0.0
    %162 = vmatpush2.msra.mxu0 0.0
    %163 = vmatprep.subr.mxu0 0.0
    %164 = vmatpush2.msra.mxu0 0.0
    %165 = vmatprep.subr.mxu0 0.0
    %166 = vmatpush2.msra.mxu0 0.0
    %167 = vmatprep.subr.mxu0 0.0
    %168 = vmatpush2.msra.mxu0 0.0
    %169 = vmatprep.subr.mxu0 0.0
    %170 = vmatpush2.msra.mxu0 0.0
    %171 = vmatprep.subr.mxu0 0.0
    %172 = vmatpush2.msra.mxu0 0.0
    %173 = vmatprep.subr.mxu0 0.0
    %174 = vmatpush2.msra.mxu0 0.0
    %175 = vmatprep.subr.mxu0 0.0
    %176 = vmatpush2.msra.mxu0 0.0
    %177 = vmatprep.subr.mxu0 0.0
    %178 = vmatpush2.msra.mxu0 0.0
    %179 = vmatprep.mubr.f32.mxu0 0.0
    %180 = vmatmul.mubr.f32.gmra.mxu0 %v92
    %v181 = vpop.f32.mrf.mxu0
    %v182 = vadd.f32 %v53, %v181
    %v183 = vpop.f32.mrf.mxu0
    %184 = vmatprep.mubr.f32.mxu0 0.0
    %185 = vmatmul.mubr.f32.gmra.mxu0 %v95
    %v186 = vpop.f32.mrf.mxu0
    %v187 = vadd.f32 %v58, %v186
    %v188 = vpop.f32.mrf.mxu0
    %189 = vmatprep.mubr.f32.mxu0 0.0
    %190 = vmatmul.mubr.f32.gmra.mxu0 %v98
    %v191 = vpop.f32.mrf.mxu0
    %v192 = vadd.f32 %v63, %v191
    %v193 = vpop.f32.mrf.mxu0
    %194 = vmatprep.mubr.f32.mxu0 0.0
    %195 = vmatmul.mubr.f32.gmra.mxu0 %v101
    %v196 = vpop.f32.mrf.mxu0
    %v197 = vadd.f32 %v68, %v196
    %v198 = vpop.f32.mrf.mxu0
    %199 = vmatprep.mubr.f32.mxu0 0.0
    %200 = vmatmul.mubr.f32.gmra.mxu0 %v104
    %v201 = vpop.f32.mrf.mxu0
    %v202 = vadd.f32 %v73, %v201
    %v203 = vpop.f32.mrf.mxu0
    %204 = vmatprep.mubr.f32.mxu0 0.0
    %205 = vmatmul.mubr.f32.gmra.mxu0 %v107
    %v206 = vpop.f32.mrf.mxu0
    %v207 = vadd.f32 %v78, %v206
    %v208 = vpop.f32.mrf.mxu0
    %209 = vmatprep.mubr.f32.mxu0 0.0
    %210 = vmatmul.mubr.f32.gmra.mxu0 %v110
    %v211 = vpop.f32.mrf.mxu0
    %v212 = vadd.f32 %v83, %v211
    %v213 = vpop.f32.mrf.mxu0
    %214 = vmatprep.mubr.f32.mxu0 0.0
    %215 = vmatmul.mubr.f32.gmra.mxu0 %v113
    %v216 = vpop.f32.mrf.mxu0
    %v217 = vadd.f32 %v88, %v216
    %v218 = vpop.f32.mrf.mxu0
    %219 = vdwg.mxu0
    %v220 = vmax.f32 %v182, 0.0
    %v221 = vmax.f32 %v187, 0.0
    %v222 = vmax.f32 %v192, 0.0
    %v223 = vmax.f32 %v197, 0.0
    %v224 = vmax.f32 %v202, 0.0
    %v225 = vmax.f32 %v207, 0.0
    %v226 = vmax.f32 %v212, 0.0
    %v227 = vmax.f32 %v217, 0.0
    %v228 = vld [vmem:[%s3] sm:$0xff]
    %v229 = vld [vmem:[%s3 + $0x8] sm:$0xff]
    %v230 = vld [vmem:[%s3 + $0x10] sm:$0xff]
    %v231 = vld [vmem:[%s3 + $0x18] sm:$0xff]
    %v232 = vld [vmem:[%s3 + $0x20] sm:$0xff]
    %v233 = vld [vmem:[%s3 + $0x28] sm:$0xff]
    %v234 = vld [vmem:[%s3 + $0x30] sm:$0xff]
    %v235 = vld [vmem:[%s3 + $0x38] sm:$0xff]
    %v236 = vld [vmem:[%s4] sm:$0xff]
    %v237 = vld [vmem:[%s4 + $0x8] sm:$0xff]
    %v238 = vld [vmem:[%s4 + $0x10] sm:$0xff]
    %v239 = vld [vmem:[%s4 + $0x18] sm:$0xff]
    %v240 = vld [vmem:[%s4 + $0x20] sm:$0xff]
    %v241 = vld [vmem:[%s4 + $0x28] sm:$0xff]
    %v242 = vld [vmem:[%s4 + $0x30] sm:$0xff]
    %v243 = vld [vmem:[%s4 + $0x38] sm:$0xff]
    %245 = vset.pattern.permute.xlu0 0
    %246 = vperm.xlu0 %245, %v236
    %v247 = vpop.permute.xlu0 %246
    %250 = vset.pattern.permute.xlu0 0
    %251 = vperm.xlu0 %250, %v237
    %v252 = vpop.permute.xlu0 %251
    %255 = vset.pattern.permute.xlu0 0
    %256 = vperm.xlu0 %255, %v238
    %v257 = vpop.permute.xlu0 %256
    %260 = vset.pattern.permute.xlu0 0
    %261 = vperm.xlu0 %260, %v239
    %v262 = vpop.permute.xlu0 %261
    %265 = vset.pattern.permute.xlu0 0
    %266 = vperm.xlu0 %265, %v240
    %v267 = vpop.permute.xlu0 %266
    %270 = vset.pattern.permute.xlu0 0
    %271 = vperm.xlu0 %270, %v241
    %v272 = vpop.permute.xlu0 %271
    %275 = vset.pattern.permute.xlu0 0
    %276 = vperm.xlu0 %275, %v242
    %v277 = vpop.permute.xlu0 %276
    %280 = vset.pattern.permute.xlu0 0
    %281 = vperm.xlu0 %280, %v243
    %v282 = vpop.permute.xlu0 %281
    %vm284 = vcmask 523264
    %v286 = vsel %vm284, %v228, 0
    %v289 = vsel %vm284, %v229, 0
    %v292 = vsel %vm284, %v230, 0
    %v295 = vsel %vm284, %v231, 0
    %v298 = vsel %vm284, %v232, 0
    %v301 = vsel %vm284, %v233, 0
    %v304 = vsel %vm284, %v234, 0
    %v307 = vsel %vm284, %v235, 0
    %309 = vmatprep.subr.mxu0 0.0
    %310 = vmatpush1.msra.mxu0 0.0
    %311 = vmatprep.subr.mxu0 0.0
    %312 = vmatpush1.msra.mxu0 0.0
    %313 = vmatprep.subr.mxu0 0.0
    %314 = vmatpush1.msra.mxu0 0.0
    %315 = vmatprep.subr.mxu0 0.0
    %316 = vmatpush1.msra.mxu0 0.0
    %317 = vmatprep.subr.mxu0 0.0
    %318 = vmatpush1.msra.mxu0 0.0
    %319 = vmatprep.subr.mxu0 0.0
    %320 = vmatpush1.msra.mxu0 0.0
    %321 = vmatprep.subr.mxu0 0.0
    %322 = vmatpush1.msra.mxu0 0.0
    %323 = vmatprep.subr.mxu0 0.0
    %324 = vmatpush1.msra.mxu0 0.0
    %325 = vmatprep.subr.mxu0 0.0
    %326 = vmatpush1.msra.mxu0 %v227
    %327 = vmatprep.subr.mxu0 0.0
    %328 = vmatpush1.msra.mxu0 %v226
    %329 = vmatprep.subr.mxu0 0.0
    %330 = vmatpush1.msra.mxu0 %v225
    %331 = vmatprep.subr.mxu0 0.0
    %332 = vmatpush1.msra.mxu0 %v224
    %333 = vmatprep.subr.mxu0 0.0
    %334 = vmatpush1.msra.mxu0 %v223
    %335 = vmatprep.subr.mxu0 0.0
    %336 = vmatpush1.msra.mxu0 %v222
    %337 = vmatprep.subr.mxu0 0.0
    %338 = vmatpush1.msra.mxu0 %v221
    %339 = vmatprep.subr.mxu0 0.0
    %340 = vmatpush1.msra.mxu0 %v220
    %341 = vmatprep.subr.mxu0 0.0
    %342 = vmatpush2.msra.mxu0 0.0
    %343 = vmatprep.subr.mxu0 0.0
    %344 = vmatpush2.msra.mxu0 0.0
    %345 = vmatprep.subr.mxu0 0.0
    %346 = vmatpush2.msra.mxu0 0.0
    %347 = vmatprep.subr.mxu0 0.0
    %348 = vmatpush2.msra.mxu0 0.0
    %349 = vmatprep.subr.mxu0 0.0
    %350 = vmatpush2.msra.mxu0 0.0
    %351 = vmatprep.subr.mxu0 0.0
    %352 = vmatpush2.msra.mxu0 0.0
    %353 = vmatprep.subr.mxu0 0.0
    %354 = vmatpush2.msra.mxu0 0.0
    %355 = vmatprep.subr.mxu0 0.0
    %356 = vmatpush2.msra.mxu0 0.0
    %357 = vmatprep.subr.mxu0 0.0
    %358 = vmatpush2.msra.mxu0 0.0
    %359 = vmatprep.subr.mxu0 0.0
    %360 = vmatpush2.msra.mxu0 0.0
    %361 = vmatprep.subr.mxu0 0.0
    %362 = vmatpush2.msra.mxu0 0.0
    %363 = vmatprep.subr.mxu0 0.0
    %364 = vmatpush2.msra.mxu0 0.0
    %365 = vmatprep.subr.mxu0 0.0
    %366 = vmatpush2.msra.mxu0 0.0
    %367 = vmatprep.subr.mxu0 0.0
    %368 = vmatpush2.msra.mxu0 0.0
    %369 = vmatprep.subr.mxu0 0.0
    %370 = vmatpush2.msra.mxu0 0.0
    %371 = vmatprep.subr.mxu0 0.0
    %372 = vmatpush2.msra.mxu0 0.0
    %373 = vmatprep.mubr.f32.mxu0 0.0
    %374 = vmatmul.mubr.f32.gmra.mxu0 %v286
    %v375 = vpop.f32.mrf.mxu0
    %v376 = vadd.f32 %v247, %v375
    %v377 = vpop.f32.mrf.mxu0
    %378 = vmatprep.mubr.f32.mxu0 0.0
    %379 = vmatmul.mubr.f32.gmra.mxu0 %v289
    %v380 = vpop.f32.mrf.mxu0
    %v381 = vadd.f32 %v252, %v380
    %v382 = vpop.f32.mrf.mxu0
    %383 = vmatprep.mubr.f32.mxu0 0.0
    %384 = vmatmul.mubr.f32.gmra.mxu0 %v292
    %v385 = vpop.f32.mrf.mxu0
    %v386 = vadd.f32 %v257, %v385
    %v387 = vpop.f32.mrf.mxu0
    %388 = vmatprep.mubr.f32.mxu0 0.0
    %389 = vmatmul.mubr.f32.gmra.mxu0 %v295
    %v390 = vpop.f32.mrf.mxu0
    %v391 = vadd.f32 %v262, %v390
    %v392 = vpop.f32.mrf.mxu0
    %393 = vmatprep.mubr.f32.mxu0 0.0
    %394 = vmatmul.mubr.f32.gmra.mxu0 %v298
    %v395 = vpop.f32.mrf.mxu0
    %v396 = vadd.f32 %v267, %v395
    %v397 = vpop.f32.mrf.mxu0
    %398 = vmatprep.mubr.f32.mxu0 0.0
    %399 = vmatmul.mubr.f32.gmra.mxu0 %v301
    %v400 = vpop.f32.mrf.mxu0
    %v401 = vadd.f32 %v272, %v400
    %v402 = vpop.f32.mrf.mxu0
    %403 = vmatprep.mubr.f32.mxu0 0.0
    %404 = vmatmul.mubr.f32.gmra.mxu0 %v304
    %v405 = vpop.f32.mrf.mxu0
    %v406 = vadd.f32 %v277, %v405
    %v407 = vpop.f32.mrf.mxu0
    %408 = vmatprep.mubr.f32.mxu0 0.0
    %409 = vmatmul.mubr.f32.gmra.mxu0 %v307
    %v410 = vpop.f32.mrf.mxu0
    %v411 = vadd.f32 %v282, %v410
    %v412 = vpop.f32.mrf.mxu0
    %413 = vdwg.mxu0
    %v414 = vmax.f32 %v376, 0.0
    %v415 = vmax.f32 %v381, 0.0
    %v416 = vmax.f32 %v386, 0.0
    %v417 = vmax.f32 %v391, 0.0
    %v418 = vmax.f32 %v396, 0.0
    %v419 = vmax.f32 %v401, 0.0
    %v420 = vmax.f32 %v406, 0.0
    %v421 = vmax.f32 %v411, 0.0
    %v422 = vld [vmem:[%s5] sm:$0xff]
    %v423 = vld [vmem:[%s5 + $0x8] sm:$0xff]
    %v424 = vld [vmem:[%s5 + $0x10] sm:$0xff]
    %v425 = vld [vmem:[%s5 + $0x18] sm:$0xff]
    %v426 = vld [vmem:[%s6] sm:$0xff]
    %v427 = vld [vmem:[%s6 + $0x8] sm:$0xff]
    %v428 = vld [vmem:[%s6 + $0x10] sm:$0xff]
    %v429 = vld [vmem:[%s6 + $0x18] sm:$0xff]
    %431 = vset.pattern.permute.xlu0 0
    %432 = vperm.xlu0 %431, %v426
    %v433 = vpop.permute.xlu0 %432
    %436 = vset.pattern.permute.xlu0 0
    %437 = vperm.xlu0 %436, %v427
    %v438 = vpop.permute.xlu0 %437
    %441 = vset.pattern.permute.xlu0 0
    %442 = vperm.xlu0 %441, %v428
    %v443 = vpop.permute.xlu0 %442
    %446 = vset.pattern.permute.xlu0 0
    %447 = vperm.xlu0 %446, %v429
    %v448 = vpop.permute.xlu0 %447
    %v451 = vsel %vm284, %v422, 0
    %v454 = vsel %vm284, %v423, 0
    %v457 = vsel %vm284, %v424, 0
    %v460 = vsel %vm284, %v425, 0
    %462 = vmatprep.subr.mxu0 0.0
    %463 = vmatpush1.msra.mxu0 0.0
    %464 = vmatprep.subr.mxu0 0.0
    %465 = vmatpush1.msra.mxu0 0.0
    %466 = vmatprep.subr.mxu0 0.0
    %467 = vmatpush1.msra.mxu0 0.0
    %468 = vmatprep.subr.mxu0 0.0
    %469 = vmatpush1.msra.mxu0 0.0
    %470 = vmatprep.subr.mxu0 0.0
    %471 = vmatpush1.msra.mxu0 0.0
    %472 = vmatprep.subr.mxu0 0.0
    %473 = vmatpush1.msra.mxu0 0.0
    %474 = vmatprep.subr.mxu0 0.0
    %475 = vmatpush1.msra.mxu0 0.0
    %476 = vmatprep.subr.mxu0 0.0
    %477 = vmatpush1.msra.mxu0 0.0
    %478 = vmatprep.subr.mxu0 0.0
    %479 = vmatpush1.msra.mxu0 %v421
    %480 = vmatprep.subr.mxu0 0.0
    %481 = vmatpush1.msra.mxu0 %v420
    %482 = vmatprep.subr.mxu0 0.0
    %483 = vmatpush1.msra.mxu0 %v419
    %484 = vmatprep.subr.mxu0 0.0
    %485 = vmatpush1.msra.mxu0 %v418
    %486 = vmatprep.subr.mxu0 0.0
    %487 = vmatpush1.msra.mxu0 %v417
    %488 = vmatprep.subr.mxu0 0.0
    %489 = vmatpush1.msra.mxu0 %v416
    %490 = vmatprep.subr.mxu0 0.0
    %491 = vmatpush1.msra.mxu0 %v415
    %492 = vmatprep.subr.mxu0 0.0
    %493 = vmatpush1.msra.mxu0 %v414
    %494 = vmatprep.subr.mxu0 0.0
    %495 = vmatpush2.msra.mxu0 0.0
    %496 = vmatprep.subr.mxu0 0.0
    %497 = vmatpush2.msra.mxu0 0.0
    %498 = vmatprep.subr.mxu0 0.0
    %499 = vmatpush2.msra.mxu0 0.0
    %500 = vmatprep.subr.mxu0 0.0
    %501 = vmatpush2.msra.mxu0 0.0
    %502 = vmatprep.subr.mxu0 0.0
    %503 = vmatpush2.msra.mxu0 0.0
    %504 = vmatprep.subr.mxu0 0.0
    %505 = vmatpush2.msra.mxu0 0.0
    %506 = vmatprep.subr.mxu0 0.0
    %507 = vmatpush2.msra.mxu0 0.0
    %508 = vmatprep.subr.mxu0 0.0
    %509 = vmatpush2.msra.mxu0 0.0
    %510 = vmatprep.subr.mxu0 0.0
    %511 = vmatpush2.msra.mxu0 0.0
    %512 = vmatprep.subr.mxu0 0.0
    %513 = vmatpush2.msra.mxu0 0.0
    %514 = vmatprep.subr.mxu0 0.0
    %515 = vmatpush2.msra.mxu0 0.0
    %516 = vmatprep.subr.mxu0 0.0
    %517 = vmatpush2.msra.mxu0 0.0
    %518 = vmatprep.subr.mxu0 0.0
    %519 = vmatpush2.msra.mxu0 0.0
    %520 = vmatprep.subr.mxu0 0.0
    %521 = vmatpush2.msra.mxu0 0.0
    %522 = vmatprep.subr.mxu0 0.0
    %523 = vmatpush2.msra.mxu0 0.0
    %524 = vmatprep.subr.mxu0 0.0
    %525 = vmatpush2.msra.mxu0 0.0
    %526 = vmatprep.mubr.f32.mxu0 0.0
    %527 = vmatmul.mubr.f32.gmra.mxu0 %v451
    %v528 = vpop.f32.mrf.mxu0
    %v529 = vadd.f32 %v433, %v528
    %v530 = vpop.f32.mrf.mxu0
    %531 = vmatprep.mubr.f32.mxu0 0.0
    %532 = vmatmul.mubr.f32.gmra.mxu0 %v454
    %v533 = vpop.f32.mrf.mxu0
    %v534 = vadd.f32 %v438, %v533
    %v535 = vpop.f32.mrf.mxu0
    %536 = vmatprep.mubr.f32.mxu0 0.0
    %537 = vmatmul.mubr.f32.gmra.mxu0 %v457
    %v538 = vpop.f32.mrf.mxu0
    %v539 = vadd.f32 %v443, %v538
    %v540 = vpop.f32.mrf.mxu0
    %541 = vmatprep.mubr.f32.mxu0 0.0
    %542 = vmatmul.mubr.f32.gmra.mxu0 %v460
    %v543 = vpop.f32.mrf.mxu0
    %v544 = vadd.f32 %v448, %v543
    %v545 = vpop.f32.mrf.mxu0
    %546 = vdwg.mxu0
    %v547 = vmax.f32 %v529, 0.0
    %v548 = vmax.f32 %v534, 0.0
    %v549 = vmax.f32 %v539, 0.0
    %v550 = vmax.f32 %v544, 0.0
    %v551 = vld [vmem:[%s7] sm:$0xff]
    %v552 = vld [vmem:[%s7 + $0x8] sm:$0xff]
    %v553 = vld [vmem:[%s7 + $0x10] sm:$0xff]
    %v554 = vld [vmem:[%s7 + $0x18] sm:$0xff]
    %v555 = vld [vmem:[%s8] sm:$0xff]
    %v556 = vld [vmem:[%s8 + $0x8] sm:$0xff]
    %v557 = vld [vmem:[%s8 + $0x10] sm:$0xff]
    %v558 = vld [vmem:[%s8 + $0x18] sm:$0xff]
    %560 = vset.pattern.permute.xlu0 0
    %561 = vperm.xlu0 %560, %v555
    %v562 = vpop.permute.xlu0 %561
    %565 = vset.pattern.permute.xlu0 0
    %566 = vperm.xlu0 %565, %v556
    %v567 = vpop.permute.xlu0 %566
    %570 = vset.pattern.permute.xlu0 0
    %571 = vperm.xlu0 %570, %v557
    %v572 = vpop.permute.xlu0 %571
    %575 = vset.pattern.permute.xlu0 0
    %576 = vperm.xlu0 %575, %v558
    %v577 = vpop.permute.xlu0 %576
    %vm579 = vcmask 261120
    %v581 = vsel %vm579, %v551, 0
    %v584 = vsel %vm579, %v552, 0
    %v587 = vsel %vm579, %v553, 0
    %v590 = vsel %vm579, %v554, 0
    %592 = vmatprep.subr.mxu0 0.0
    %593 = vmatpush1.msra.mxu0 0.0
    %594 = vmatprep.subr.mxu0 0.0
    %595 = vmatpush1.msra.mxu0 0.0
    %596 = vmatprep.subr.mxu0 0.0
    %597 = vmatpush1.msra.mxu0 0.0
    %598 = vmatprep.subr.mxu0 0.0
    %599 = vmatpush1.msra.mxu0 0.0
    %600 = vmatprep.subr.mxu0 0.0
    %601 = vmatpush1.msra.mxu0 0.0
    %602 = vmatprep.subr.mxu0 0.0
    %603 = vmatpush1.msra.mxu0 0.0
    %604 = vmatprep.subr.mxu0 0.0
    %605 = vmatpush1.msra.mxu0 0.0
    %606 = vmatprep.subr.mxu0 0.0
    %607 = vmatpush1.msra.mxu0 0.0
    %608 = vmatprep.subr.mxu0 0.0
    %609 = vmatpush1.msra.mxu0 0.0
    %610 = vmatprep.subr.mxu0 0.0
    %611 = vmatpush1.msra.mxu0 0.0
    %612 = vmatprep.subr.mxu0 0.0
    %613 = vmatpush1.msra.mxu0 0.0
    %614 = vmatprep.subr.mxu0 0.0
    %615 = vmatpush1.msra.mxu0 0.0
    %616 = vmatprep.subr.mxu0 0.0
    %617 = vmatpush1.msra.mxu0 %v550
    %618 = vmatprep.subr.mxu0 0.0
    %619 = vmatpush1.msra.mxu0 %v549
    %620 = vmatprep.subr.mxu0 0.0
    %621 = vmatpush1.msra.mxu0 %v548
    %622 = vmatprep.subr.mxu0 0.0
    %623 = vmatpush1.msra.mxu0 %v547
    %624 = vmatprep.subr.mxu0 0.0
    %625 = vmatpush2.msra.mxu0 0.0
    %626 = vmatprep.subr.mxu0 0.0
    %627 = vmatpush2.msra.mxu0 0.0
    %628 = vmatprep.subr.mxu0 0.0
    %629 = vmatpush2.msra.mxu0 0.0
    %630 = vmatprep.subr.mxu0 0.0
    %631 = vmatpush2.msra.mxu0 0.0
    %632 = vmatprep.subr.mxu0 0.0
    %633 = vmatpush2.msra.mxu0 0.0
    %634 = vmatprep.subr.mxu0 0.0
    %635 = vmatpush2.msra.mxu0 0.0
    %636 = vmatprep.subr.mxu0 0.0
    %637 = vmatpush2.msra.mxu0 0.0
    %638 = vmatprep.subr.mxu0 0.0
    %639 = vmatpush2.msra.mxu0 0.0
    %640 = vmatprep.subr.mxu0 0.0
    %641 = vmatpush2.msra.mxu0 0.0
    %642 = vmatprep.subr.mxu0 0.0
    %643 = vmatpush2.msra.mxu0 0.0
    %644 = vmatprep.subr.mxu0 0.0
    %645 = vmatpush2.msra.mxu0 0.0
    %646 = vmatprep.subr.mxu0 0.0
    %647 = vmatpush2.msra.mxu0 0.0
    %648 = vmatprep.subr.mxu0 0.0
    %649 = vmatpush2.msra.mxu0 0.0
    %650 = vmatprep.subr.mxu0 0.0
    %651 = vmatpush2.msra.mxu0 0.0
    %652 = vmatprep.subr.mxu0 0.0
    %653 = vmatpush2.msra.mxu0 0.0
    %654 = vmatprep.subr.mxu0 0.0
    %655 = vmatpush2.msra.mxu0 0.0
    %656 = vmatprep.mubr.f32.mxu0 0.0
    %657 = vmatmul.mubr.f32.gmra.mxu0 %v581
    %v658 = vpop.f32.mrf.mxu0
    %v659 = vadd.f32 %v562, %v658
    %v660 = vpop.f32.mrf.mxu0
    %661 = vmatprep.mubr.f32.mxu0 0.0
    %662 = vmatmul.mubr.f32.gmra.mxu0 %v584
    %v663 = vpop.f32.mrf.mxu0
    %v664 = vadd.f32 %v567, %v663
    %v665 = vpop.f32.mrf.mxu0
    %666 = vmatprep.mubr.f32.mxu0 0.0
    %667 = vmatmul.mubr.f32.gmra.mxu0 %v587
    %v668 = vpop.f32.mrf.mxu0
    %v669 = vadd.f32 %v572, %v668
    %v670 = vpop.f32.mrf.mxu0
    %671 = vmatprep.mubr.f32.mxu0 0.0
    %672 = vmatmul.mubr.f32.gmra.mxu0 %v590
    %v673 = vpop.f32.mrf.mxu0
    %v674 = vadd.f32 %v577, %v673
    %v675 = vpop.f32.mrf.mxu0
    %676 = vdwg.mxu0
    %677 = vst [vmem:[#allocation2] sm:$0xff] %v659
    %678 = vst [vmem:[#allocation2 + $0x8] sm:$0xff] %v664
    %679 = vst [vmem:[#allocation2 + $0x10] sm:$0xff] %v669
    %680 = vst [vmem:[#allocation2 + $0x18] sm:$0xff] %v674
    // Predicated region
    $region38: #{tpu_custom_call.1} parent=1 // pred_check
      _
    $region39: #{tpu_custom_call.1} parent=1 // pred_check_branch
      %682 = sbr.rel (0) target = $region41
    $region40: #{tpu_custom_call.1} parent=1 // pred_region
      %s684 = ssub.s32 512, 512
      %685 = vsyncadd [#allocation3], %s684
      %s686 = sshll.u32 [#allocation2], 4
      %s687 = int_to_ptr.vmem [resolvable:$true] %s686
      %692 = dma.vmem_to_hbm [thread:$0]  %s687, 512, %s9, [#allocation3], 128, 128, 8
    $region41: #{tpu_custom_call.1} parent=1 // pred_fallthru
      _
    // Predicated region
    $region42: #{tpu_custom_call.1} parent=1 // pred_check
      _
    $region43: #{tpu_custom_call.1} parent=1 // pred_check_branch
      %694 = sbr.rel (0) target = $region45
    $region44: #{tpu_custom_call.1} parent=1 // pred_region
      %695 = dma.done [#allocation3], 512
    $region45: #{tpu_custom_call.1} parent=1 // pred_fallthru
      _
    %696 = vsyncpa [#allocation3], 1

</llo_original>
